<compile_context>
chip_gen: v7x
topology: tpu7x:2x2x1
jax: 0.10.0
libtpu: 0.0.40
codegen_flags: <defaults>
</compile_context>

<pallas_src>
import jax
import jax.numpy as jnp
from jax.experimental import pallas as pl
from jax.experimental.pallas import tpu as pltpu


def _normalize_kernel(x_ref, scale_ref, bias_ref, o_ref):
    # x_ref / o_ref     : (row_tile, lane_tile) lane-dense tile of the (R, L) view
    # scale_ref/bias_ref: (R_pad, 1) float32 per-row coefficients, resident in
    #                     VMEM for the whole grid (constant index_map).
    r = pl.program_id(0)
    rt = x_ref.shape[0]
    rows = pl.ds(r * rt, rt)
    scale = scale_ref[rows, :]                       # (rt, 1) f32
    bias = bias_ref[rows, :]                         # (rt, 1) f32
    y = x_ref[...].astype(jnp.float32) * scale + bias
    o_ref[...] = y.astype(o_ref.dtype)


def _choose_tiles(R, L, itemsize):
    """Pick (row_tile, lane_tile) so each data tile is <= ~4 MiB."""
    sublane = max(8, 32 // itemsize)                 # f32:8, bf16:16, int8:32
    max_tile_bytes = 4 * 1024 * 1024

    # Lane tiling only when a single sublane-group of full rows already blows
    # the budget (very large H*W) and L is 128-aligned.  Otherwise keep the
    # full lane extent (legal even if L % 128 != 0; stores become masked).
    if L % 128 == 0 and L * sublane * itemsize > max_tile_bytes:
        lane_tile = max(128, (max_tile_bytes // (sublane * itemsize)) // 128 * 128)
        lane_tile = min(lane_tile, L)
    else:
        lane_tile = L

    row_bytes = lane_tile * itemsize
    rows_fit = max(1, max_tile_bytes // row_bytes)
    if rows_fit >= R:
        row_tile = R                                 # single full-extent row block
    else:
        row_tile = max(sublane, rows_fit // sublane * sublane)

    # v7x megacore: ensure >= 2 parallel blocks for non-tiny inputs so both
    # TensorCores get work (no effect on v5e/v6e which have a single TC).
    total_bytes = R * L * itemsize
    if (pl.cdiv(R, row_tile) * pl.cdiv(L, lane_tile) == 1
            and total_bytes > (1 << 20) and R >= 2 * sublane):
        row_tile = max(sublane,
                       ((R + 1) // 2 + sublane - 1) // sublane * sublane)
    return row_tile, lane_tile


def normalization(x, mean=(0.485, 0.456, 0.406), std=(0.229, 0.224, 0.225)):
    """Pallas implementation of Normalization.forward for NCHW input."""
    assert jnp.issubdtype(x.dtype, jnp.floating), (
        "Normalization expects a floating-point input dtype")
    B, C, H, W = x.shape
    L = H * W
    R = B * C
    itemsize = jnp.dtype(x.dtype).itemsize

    # y = (x - mean) / std  ->  y = x * scale + bias, coefficients in float32.
    mean32 = jnp.asarray(mean, jnp.float32)
    std32 = jnp.asarray(std, jnp.float32)
    assert mean32.shape == (C,) and std32.shape == (C,), "mean/std must have C entries"
    scale = 1.0 / std32                              # (C,) f32
    bias = -mean32 / std32                           # (C,) f32
    scale_rows = jnp.tile(scale, B).reshape(R, 1)    # (R, 1) f32
    bias_rows = jnp.tile(bias, B).reshape(R, 1)

    row_tile, lane_tile = _choose_tiles(R, L, itemsize)
    n_rb = pl.cdiv(R, row_tile)
    n_lb = pl.cdiv(L, lane_tile)

    # Pad the coefficient columns so the in-kernel pl.ds(r*row_tile, row_tile)
    # slice is always in-bounds on the last (partial) row block.
    R_pad = n_rb * row_tile
    if R_pad > R:
        scale_rows = jnp.pad(scale_rows, ((0, R_pad - R), (0, 0)), constant_values=1.0)
        bias_rows = jnp.pad(bias_rows, ((0, R_pad - R), (0, 0)), constant_values=0.0)

    # Lane-dense 2D view: rows = (batch, channel), cols = flattened spatial.
    x2 = x.reshape(R, L)

    cost = pl.CostEstimate(
        flops=2 * R * L,
        transcendentals=0,
        bytes_accessed=2 * R * L * itemsize + 2 * R_pad * 4,
    )

    out2 = pl.pallas_call(
        _normalize_kernel,
        out_shape=jax.ShapeDtypeStruct((R, L), x.dtype),
        grid=(n_rb, n_lb),
        in_specs=[
            pl.BlockSpec((row_tile, lane_tile), lambda r, l: (r, l)),
            pl.BlockSpec((R_pad, 1), lambda r, l: (0, 0)),   # resident, no re-DMA
            pl.BlockSpec((R_pad, 1), lambda r, l: (0, 0)),   # resident, no re-DMA
        ],
        out_specs=pl.BlockSpec((row_tile, lane_tile), lambda r, l: (r, l)),
        compiler_params=pltpu.CompilerParams(
            dimension_semantics=("parallel", "parallel"),
            vmem_limit_bytes=48 << 20,
        ),
        cost_estimate=cost,
    )(x2, scale_rows, bias_rows)

    return out2.reshape(B, C, H, W)


if __name__ == "__main__":
    key = jax.random.PRNGKey(0)
    # NCHW image batch: batch=2, channels=3 (matches the 3-entry mean/std),
    # spatial 16x16 -> lane dim 256 (multiple of 128, unmasked stores).
    x = jax.random.uniform(key, (2, 3, 16, 16), dtype=jnp.float32)

    out = normalization(x)
    out = jax.block_until_ready(out)

    # Reference: plain JAX channel-wise normalize (mirrors transforms.Normalize
    # applied per batch element in the PyTorch forward loop).
    mean = jnp.asarray([0.485, 0.456, 0.406], dtype=jnp.float32)
    std = jnp.asarray([0.229, 0.224, 0.225], dtype=jnp.float32)
    ref = (x - mean[None, :, None, None]) / std[None, :, None, None]

    assert out.shape == ref.shape, (out.shape, ref.shape)
    assert out.dtype == ref.dtype, (out.dtype, ref.dtype)
    assert jnp.allclose(out, ref, rtol=1e-5, atol=1e-6), "mismatch vs reference normalize"

    print("KERNEL_OK")
</pallas_src>

<mosaic_0001>
module attributes {stable_mosaic.version = 11 : i64} {
  func.func @_normalize_kernel(%arg0: i32, %arg1: i32, %arg2: memref<6x256xf32, #tpu.memory_space<vmem>>, %arg3: memref<6x1xf32, #tpu.memory_space<vmem>>, %arg4: memref<6x1xf32, #tpu.memory_space<vmem>>, %arg5: memref<6x256xf32, #tpu.memory_space<vmem>>) attributes {dimension_semantics = [#tpu.dimension_semantics<parallel>, #tpu.dimension_semantics<parallel>], iteration_bounds = array<i64: 1, 1>, scalar_prefetch = 0 : i64, scratch_operands = 0 : i64, tpu.core_type = #tpu.core_type<tc>, window_params = [{transform_indices = @transform_0, window_bounds = array<i64: 6, 256>}, {pipeline_mode = #tpu.pipeline_mode<synchronous>, transform_indices = @transform_1, window_bounds = array<i64: 6, 1>}, {pipeline_mode = #tpu.pipeline_mode<synchronous>, transform_indices = @transform_2, window_bounds = array<i64: 6, 1>}, {transform_indices = @transform_3, window_bounds = array<i64: 6, 256>}]} {
    %c6_i32 = arith.constant 6 : i32
    %0 = arith.muli %arg0, %c6_i32 : i32
    %1 = arith.index_cast %0 : i32 to index
    %c0 = arith.constant 0 : index
    %2 = vector.load %arg3[%1, %c0] : memref<6x1xf32, #tpu.memory_space<vmem>>, vector<6x1xf32>
    %3 = arith.index_cast %0 : i32 to index
    %c0_0 = arith.constant 0 : index
    %4 = vector.load %arg4[%3, %c0_0] : memref<6x1xf32, #tpu.memory_space<vmem>>, vector<6x1xf32>
    %c0_1 = arith.constant 0 : index
    %c0_2 = arith.constant 0 : index
    %5 = vector.load %arg2[%c0_1, %c0_2] : memref<6x256xf32, #tpu.memory_space<vmem>>, vector<6x256xf32>
    %6 = vector.broadcast %2 : vector<6x1xf32> to vector<6x256xf32>
    %7 = arith.mulf %5, %6 : vector<6x256xf32>
    %8 = vector.broadcast %4 : vector<6x1xf32> to vector<6x256xf32>
    %9 = arith.addf %7, %8 : vector<6x256xf32>
    %c0_3 = arith.constant 0 : index
    %c0_4 = arith.constant 0 : index
    %10 = vector.load %arg5[%c0_3, %c0_4] : memref<6x256xf32, #tpu.memory_space<vmem>>, vector<6x256xf32>
    tpu.vector_store %arg5[%c0_3, %c0_4], %9 {strides = array<i32>} : memref<6x256xf32, #tpu.memory_space<vmem>>, vector<6x256xf32>,
    return
  }
  func.func @transform_0(%arg0: i32, %arg1: i32) -> (i32, i32) {
    %c0_i32 = arith.constant 0 : i32
    return %arg0, %arg1 : i32, i32
  }
  func.func @transform_1(%arg0: i32, %arg1: i32) -> (i32, i32) {
    %c0_i32 = arith.constant 0 : i32
    %c0_i32_0 = arith.constant 0 : i32
    %c0_i32_1 = arith.constant 0 : i32
    return %c0_i32, %c0_i32_0 : i32, i32
  }
  func.func @transform_2(%arg0: i32, %arg1: i32) -> (i32, i32) {
    %c0_i32 = arith.constant 0 : i32
    %c0_i32_0 = arith.constant 0 : i32
    %c0_i32_1 = arith.constant 0 : i32
    return %c0_i32, %c0_i32_0 : i32, i32
  }
  func.func @transform_3(%arg0: i32, %arg1: i32) -> (i32, i32) {
    %c0_i32 = arith.constant 0 : i32
    return %arg0, %arg1 : i32, i32
  }
}

</mosaic_0001>

<llo_original>
// kernel: tpu_custom_call.1
$region0: #{tpu_custom_call.1}
  #allocation0 [shape = 'u32[]', space=smem, size = 0x4, offset = 0x4, fixed_abs, tag = 'smem constant byte address 0x4 - core index']
  #allocation1 [shape = 'u32[144,128]{1,0:T(1,128)}', space=vmem, size = 0x12000, scoped, tag = 'internal scratch']
  %s0 = inlined_call_operand.vmem [shape: f32[6,256], index: 0, kind: input, shape index: {}]
  %s1 = inlined_call_operand.vmem [shape: f32[6,1], index: 1, kind: input, shape index: {}]
  %s2 = inlined_call_operand.vmem [shape: f32[6,1], index: 2, kind: input, shape index: {}]
  %s3 = inlined_call_operand.hbm [shape: f32[6,256], index: 3, kind: output, shape index: {}]
  %s4 = sld [smem:[#allocation0]]
  $region22: #{tpu_custom_call.1} parent=0
    _
  %s6 = ssub.s32 1, %s4
  %s7 = scalar_select 0, %s6, %s4
  $region1: #{tpu_custom_call.1} parent=0
    #allocation2 [shape = 'u8[8192]{0}', space=vmem, size = 0x2000, scoped, tag = 'output window, operand 0, single buffered']
    #allocation3 [shape = 's32[1]{0}', space=sflag, size = 0x4, scoped, tag = 'scoped memory for tpu_custom_call.1']
    %8 = vsyncpa [#allocation3], 0
    // Predicated region
    $region2: #{tpu_custom_call.1} parent=1 // pred_check
      _
    $region3: #{tpu_custom_call.1} parent=1 // pred_check_branch
      %10 = sbr.rel (0) target = $region5
    $region4: #{tpu_custom_call.1} parent=1 // pred_region
      _
    $region5: #{tpu_custom_call.1} parent=1 // pred_fallthru
      _
    // Predicated region
    $region6: #{tpu_custom_call.1} parent=1 // pred_check
      _
    $region7: #{tpu_custom_call.1} parent=1 // pred_check_branch
      %12 = sbr.rel (0) target = $region9
    $region8: #{tpu_custom_call.1} parent=1 // pred_region
      _
    $region9: #{tpu_custom_call.1} parent=1 // pred_fallthru
      _
    // Predicated region
    $region10: #{tpu_custom_call.1} parent=1 // pred_check
      _
    $region11: #{tpu_custom_call.1} parent=1 // pred_check_branch
      %14 = sbr.rel (0) target = $region13
    $region12: #{tpu_custom_call.1} parent=1 // pred_region
      _
    $region13: #{tpu_custom_call.1} parent=1 // pred_fallthru
      _
    %s15 = smul.u32 0, 6
    %s16 = scalar_lea.vmem %s1, %s15
    %v17 = vld [vmem:[%s16] sm:$0x3f]
    %s18 = scalar_lea.vmem %s2, %s15
    %v19 = vld [vmem:[%s18] sm:$0x3f]
    %v20 = vld [vmem:[%s0] sm:$0x3f]
    %v21 = vld [vmem:[%s0 + $0x8] sm:$0x3f]
    %23 = vset.pattern.permute.xlu0 0
    %24 = vperm.xlu0 %23, %v17
    %v25 = vpop.permute.xlu0 %24
    %v27 = vmul.f32 %v20, %v25
    %v28 = vmul.f32 %v21, %v25
    %30 = vset.pattern.permute.xlu0 0
    %31 = vperm.xlu0 %30, %v19
    %v32 = vpop.permute.xlu0 %31
    %v34 = vadd.f32 %v27, %v32
    %v35 = vadd.f32 %v28, %v32
    %36 = vst [vmem:[#allocation2] sm:$0x3f] %v34
    %37 = vst [vmem:[#allocation2 + $0x8] sm:$0x3f] %v35
    // Predicated region
    $region14: #{tpu_custom_call.1} parent=1 // pred_check
      _
    $region15: #{tpu_custom_call.1} parent=1 // pred_check_branch
      %39 = sbr.rel (0) target = $region17
    $region16: #{tpu_custom_call.1} parent=1 // pred_region
      %s41 = ssub.s32 256, 256
      %42 = vsyncadd [#allocation3], %s41
      %s44 = sshll.u32 [#allocation2], 4
      %s45 = int_to_ptr.vmem [resolvable:$true] %s44
      %47 = dma.vmem_to_hbm [thread:$0]  %s45, 256, %s3, [#allocation3]
    $region17: #{tpu_custom_call.1} parent=1 // pred_fallthru
      _
    // Predicated region
    $region18: #{tpu_custom_call.1} parent=1 // pred_check
      _
    $region19: #{tpu_custom_call.1} parent=1 // pred_check_branch
      %49 = sbr.rel (0) target = $region21
    $region20: #{tpu_custom_call.1} parent=1 // pred_region
      %50 = dma.done [#allocation3], 256
    $region21: #{tpu_custom_call.1} parent=1 // pred_fallthru
      _
    %51 = vsyncpa [#allocation3], 1

</llo_original>
